<compile_context>
chip_gen: v5e
topology: v5e:2x2
jax: 0.10.0
libtpu: 0.0.40
codegen_flags: <defaults>
</compile_context>

<pallas_src>
import jax
import jax.numpy as jnp
from jax.experimental import pallas as pl
from jax.experimental.pallas import tpu as pltpu


LANE = 128     # output label dim is padded to a full lane width
SUBLANE = 8    # batch tile must be a multiple of the sublane count


def _round_up(x, m):
    return ((x + m - 1) // m) * m


def _head_kernel(x_ref, w1_ref, b1_ref, w2_ref, b2_ref, o_ref):
    # x_ref:  [TB, H]   CLS activations tile
    # w1_ref: [H, H]    dense weight, [in, out] layout (VMEM-resident)
    # b1_ref: [1, H]    dense bias (f32)
    # w2_ref: [H, LP]   out_proj weight, zero-padded to LP = 128 lanes
    # b2_ref: [1, LP]   out_proj bias, zero-padded (f32)
    # o_ref:  [TB, LP]  lane-dense logits tile (caller dtype)
    x = x_ref[...]
    # dropout(x) -> identity (eval mode)
    h = jnp.dot(x, w1_ref[...], preferred_element_type=jnp.float32) + b1_ref[...]
    h = jnp.tanh(h)
    # dropout(h) -> identity (eval mode)
    out = jnp.dot(h.astype(w2_ref.dtype), w2_ref[...],
                  preferred_element_type=jnp.float32) + b2_ref[...]
    o_ref[...] = out.astype(o_ref.dtype)


def prepare_head_params(w_dense, b_dense, w_out, b_out, *, compute_dtype=None):
    """One-time parameter preprocessing (do NOT call per forward step).

    Weights are expected in [in, out] layout (transpose of torch.nn.Linear's
    stored [out, in] weight).  Returns a tuple consumed by
    `roberta_classification_head`.
    """
    H = w_dense.shape[0]
    L = w_out.shape[1]
    if compute_dtype is not None:
        w_dense = w_dense.astype(compute_dtype)
        w_out = w_out.astype(compute_dtype)

    LP = _round_up(max(L, LANE), LANE)
    # Zero-pad out_proj to a full 128-lane register -> unmasked lane-dense store.
    w_out_p = jnp.zeros((H, LP), w_out.dtype).at[:, :L].set(w_out)
    b_out_p = jnp.zeros((1, LP), jnp.float32).at[0, :L].set(b_out.astype(jnp.float32))
    b_dense2 = b_dense.reshape(1, H).astype(jnp.float32)
    return (w_dense, b_dense2, w_out_p, b_out_p, L)


def roberta_classification_head(features, params, *, batch_tile=None,
                                compute_dtype=None):
    """features: [B, S, H].  params from prepare_head_params.  Returns [B, L]."""
    w_dense, b_dense2, w_out_p, b_out_p, L = params
    out_dtype = features.dtype
    B, S, H = features.shape
    LP = w_out_p.shape[1]

    # CLS slice in the wrapper: only B*H bytes move, instead of streaming the
    # full [TB, S, H] block through the pipeline.
    x_cls = features[:, 0, :]
    if compute_dtype is not None:
        # Cast AFTER the slice (and weights were cast once in prepare_head_params).
        x_cls = x_cls.astype(compute_dtype)
        if w_dense.dtype != compute_dtype:
            raise ValueError("prepare_head_params must use the same compute_dtype")

    # Batch tile selection:
    #   * >= 8 sublanes, <= 256 (fills the 256-wide MXU on v6e/v7x).
    #   * When the whole (padded) batch would fit one tile, shrink so the grid
    #     has >= 2 steps -> both v7x TensorCores get work ("parallel" axis).
    if batch_tile is None:
        batch_tile = 256 if B >= 256 else 128
        b_pad8 = _round_up(B, SUBLANE)
        if b_pad8 > SUBLANE and b_pad8 <= batch_tile:
            batch_tile = max(SUBLANE, _round_up(b_pad8 // 2, SUBLANE))
    TB = min(256, _round_up(batch_tile, SUBLANE))
    BP = _round_up(B, TB)
    if BP != B:
        x_cls = jnp.pad(x_cls, ((0, BP - B), (0, 0)))

    grid = (BP // TB,)

    # VMEM residents after the CLS fix (v7x: 64 MiB/TC, ~32 MiB scoped default):
    #   single-buffered weights  H*H + H*128   (bf16 at H=1024: ~2.3 MiB)
    #   double-buffered tiles    2*(TB*H + TB*128)  (TB=256 bf16: ~0.5 MiB)
    # Comfortably inside the 32 MiB scoped default; for f32 H>=4096 pass
    # compute_dtype=bf16 or raise vmem_limit_bytes.
    x_b = jnp.dtype(x_cls.dtype).itemsize
    w1_b = jnp.dtype(w_dense.dtype).itemsize
    w2_b = jnp.dtype(w_out_p.dtype).itemsize
    o_b = jnp.dtype(out_dtype).itemsize
    cost = pl.CostEstimate(
        flops=2 * BP * H * H + 2 * BP * H * LP,
        transcendentals=BP * H,
        bytes_accessed=(BP * H * x_b + H * H * w1_b + H * LP * w2_b
                        + (H + LP) * 4 + BP * LP * o_b),
    )

    out = pl.pallas_call(
        _head_kernel,
        out_shape=jax.ShapeDtypeStruct((BP, LP), out_dtype),
        grid_spec=pltpu.PrefetchScalarGridSpec(
            num_scalar_prefetch=0,
            grid=grid,
            in_specs=[
                # Activation tile marches over batch (double-buffered pipeline).
                pl.BlockSpec((TB, H), lambda i: (i, 0)),
                # Weights / biases: constant index_map -> loaded once and kept
                # VMEM-resident; Buffered(1) avoids pointless double-buffering.
                pl.BlockSpec((H, H), lambda i: (0, 0),
                             pipeline_mode=pl.Buffered(buffer_count=1)),
                pl.BlockSpec((1, H), lambda i: (0, 0),
                             pipeline_mode=pl.Buffered(buffer_count=1)),
                pl.BlockSpec((H, LP), lambda i: (0, 0),
                             pipeline_mode=pl.Buffered(buffer_count=1)),
                pl.BlockSpec((1, LP), lambda i: (0, 0),
                             pipeline_mode=pl.Buffered(buffer_count=1)),
            ],
            out_specs=pl.BlockSpec((TB, LP), lambda i: (i, 0)),
        ),
        compiler_params=pltpu.CompilerParams(
            dimension_semantics=("parallel",),
        ),
        cost_estimate=cost,
    )(x_cls, w_dense, b_dense2, w_out_p, b_out_p)

    # Strip batch and lane padding (already in out_dtype).
    return out[:B, :L]


if __name__ == "__main__":
    # Config: hidden_size=32, num_labels=4, batch=2, seq=8
    B, S, H, L = 2, 8, 32, 4

    key = jax.random.PRNGKey(0)
    k_feat, k_w1, k_b1, k_w2, k_b2 = jax.random.split(key, 5)

    features = jax.random.normal(k_feat, (B, S, H), dtype=jnp.float32)

    # PyTorch nn.Linear stores weight as [out, in]; we keep [in, out] so the
    # kernel computes x @ W directly.
    w_dense = jax.random.normal(k_w1, (H, H), dtype=jnp.float32) * 0.05
    b_dense = jax.random.normal(k_b1, (H,), dtype=jnp.float32) * 0.05
    w_out = jax.random.normal(k_w2, (H, L), dtype=jnp.float32) * 0.05
    b_out = jax.random.normal(k_b2, (L,), dtype=jnp.float32) * 0.05

    # One-time parameter prep (f32 here to preserve the 1e-5 tolerance; pass
    # compute_dtype=jnp.bfloat16 at real RoBERTa sizes for the fast path).
    params = prepare_head_params(w_dense, b_dense, w_out, b_out)

    # TODO(synk): category_info concatenation path (features[:,0,:] ++ category_info)
    # is not implemented; this kernel covers the category_info=None forward.
    logits = roberta_classification_head(features, params)
    logits = jax.block_until_ready(logits)

    # Pure-JAX reference check.
    x_cls = features[:, 0, :]
    ref = jnp.tanh(x_cls @ w_dense + b_dense) @ w_out + b_out
    assert logits.shape == (B, L)
    assert jnp.allclose(logits, ref, atol=1e-5, rtol=1e-5), float(
        jnp.max(jnp.abs(logits - ref)))

    print("KERNEL_OK")
</pallas_src>

<mosaic_0001>
module attributes {stable_mosaic.version = 11 : i64} {
  func.func @_head_kernel(%arg0: i32, %arg1: memref<128x32xf32, #tpu.memory_space<vmem>>, %arg2: memref<32x32xf32, #tpu.memory_space<vmem>>, %arg3: memref<1x32xf32, #tpu.memory_space<vmem>>, %arg4: memref<32x128xf32, #tpu.memory_space<vmem>>, %arg5: memref<1x128xf32, #tpu.memory_space<vmem>>, %arg6: memref<128x128xf32, #tpu.memory_space<vmem>>) attributes {dimension_semantics = [#tpu.dimension_semantics<parallel>], iteration_bounds = array<i64: 1>, scalar_prefetch = 0 : i64, scratch_operands = 0 : i64, tpu.core_type = #tpu.core_type<tc>, window_params = [{transform_indices = @transform_0, window_bounds = array<i64: 128, 32>}, {pipeline_mode = #tpu.pipeline_mode<synchronous>, transform_indices = @transform_1, window_bounds = array<i64: 32, 32>}, {pipeline_mode = #tpu.pipeline_mode<synchronous>, transform_indices = @transform_2, window_bounds = array<i64: 1, 32>}, {pipeline_mode = #tpu.pipeline_mode<synchronous>, transform_indices = @transform_3, window_bounds = array<i64: 32, 128>}, {pipeline_mode = #tpu.pipeline_mode<synchronous>, transform_indices = @transform_4, window_bounds = array<i64: 1, 128>}, {transform_indices = @transform_5, window_bounds = array<i64: 128, 128>}]} {
    %c0 = arith.constant 0 : index
    %c0_0 = arith.constant 0 : index
    %0 = vector.load %arg1[%c0, %c0_0] : memref<128x32xf32, #tpu.memory_space<vmem>>, vector<128x32xf32>
    %c0_1 = arith.constant 0 : index
    %c0_2 = arith.constant 0 : index
    %1 = vector.load %arg2[%c0_1, %c0_2] : memref<32x32xf32, #tpu.memory_space<vmem>>, vector<32x32xf32>
    %cst = arith.constant dense<0.000000e+00> : vector<128x32xf32>
    %2 = tpu.matmul %0, %1, %cst {dimension_numbers = #tpu.dot_dimension_numbers<[1], [0], [0], [1], [0, 0, 1, 1], [], []>} : vector<128x32xf32>, vector<32x32xf32>, vector<128x32xf32> -> vector<128x32xf32>
    %c0_3 = arith.constant 0 : index
    %c0_4 = arith.constant 0 : index
    %3 = vector.load %arg3[%c0_3, %c0_4] : memref<1x32xf32, #tpu.memory_space<vmem>>, vector<1x32xf32>
    %4 = vector.broadcast %3 : vector<1x32xf32> to vector<128x32xf32>
    %5 = arith.addf %2, %4 : vector<128x32xf32>
    %6 = math.tanh %5 : vector<128x32xf32>
    %c0_5 = arith.constant 0 : index
    %c0_6 = arith.constant 0 : index
    %7 = vector.load %arg4[%c0_5, %c0_6] : memref<32x128xf32, #tpu.memory_space<vmem>>, vector<32x128xf32>
    %cst_7 = arith.constant dense<0.000000e+00> : vector<128x128xf32>
    %8 = tpu.matmul %6, %7, %cst_7 {dimension_numbers = #tpu.dot_dimension_numbers<[1], [0], [0], [1], [0, 0, 1, 1], [], []>} : vector<128x32xf32>, vector<32x128xf32>, vector<128x128xf32> -> vector<128x128xf32>
    %c0_8 = arith.constant 0 : index
    %c0_9 = arith.constant 0 : index
    %9 = vector.load %arg5[%c0_8, %c0_9] : memref<1x128xf32, #tpu.memory_space<vmem>>, vector<1x128xf32>
    %10 = vector.broadcast %9 : vector<1x128xf32> to vector<128x128xf32>
    %11 = arith.addf %8, %10 : vector<128x128xf32>
    %c0_10 = arith.constant 0 : index
    %c0_11 = arith.constant 0 : index
    %12 = vector.load %arg6[%c0_10, %c0_11] : memref<128x128xf32, #tpu.memory_space<vmem>>, vector<128x128xf32>
    tpu.vector_store %arg6[%c0_10, %c0_11], %11 {strides = array<i32>} : memref<128x128xf32, #tpu.memory_space<vmem>>, vector<128x128xf32>,
    return
  }
  func.func @transform_0(%arg0: i32) -> (i32, i32) {
    %c0_i32 = arith.constant 0 : i32
    %c0_i32_0 = arith.constant 0 : i32
    return %arg0, %c0_i32 : i32, i32
  }
  func.func @transform_1(%arg0: i32) -> (i32, i32) {
    %c0_i32 = arith.constant 0 : i32
    %c0_i32_0 = arith.constant 0 : i32
    %c0_i32_1 = arith.constant 0 : i32
    return %c0_i32, %c0_i32_0 : i32, i32
  }
  func.func @transform_2(%arg0: i32) -> (i32, i32) {
    %c0_i32 = arith.constant 0 : i32
    %c0_i32_0 = arith.constant 0 : i32
    %c0_i32_1 = arith.constant 0 : i32
    return %c0_i32, %c0_i32_0 : i32, i32
  }
  func.func @transform_3(%arg0: i32) -> (i32, i32) {
    %c0_i32 = arith.constant 0 : i32
    %c0_i32_0 = arith.constant 0 : i32
    %c0_i32_1 = arith.constant 0 : i32
    return %c0_i32, %c0_i32_0 : i32, i32
  }
  func.func @transform_4(%arg0: i32) -> (i32, i32) {
    %c0_i32 = arith.constant 0 : i32
    %c0_i32_0 = arith.constant 0 : i32
    %c0_i32_1 = arith.constant 0 : i32
    return %c0_i32, %c0_i32_0 : i32, i32
  }
  func.func @transform_5(%arg0: i32) -> (i32, i32) {
    %c0_i32 = arith.constant 0 : i32
    %c0_i32_0 = arith.constant 0 : i32
    return %arg0, %c0_i32 : i32, i32
  }
}

</mosaic_0001>

<llo_original>
// kernel: tpu_custom_call.1
$region0: #{tpu_custom_call.1}
  #allocation0 [shape = 'u32[]', space=smem, size = 0x4, offset = 0x4, fixed_abs, tag = 'smem constant byte address 0x4 - core index']
  #allocation1 [shape = 'u32[72,128]{1,0:T(1,128)}', space=vmem, size = 0x9000, scoped, tag = 'internal scratch']
  %s0 = inlined_call_operand.vmem [shape: f32[128,32], index: 0, kind: input, shape index: {}]
  %s1 = inlined_call_operand.vmem [shape: f32[32,32], index: 1, kind: input, shape index: {}]
  %s2 = inlined_call_operand.vmem [shape: f32[1,32], index: 2, kind: input, shape index: {}]
  %s3 = inlined_call_operand.vmem [shape: f32[32,128], index: 3, kind: input, shape index: {}]
  %s4 = inlined_call_operand.vmem [shape: f32[1,128], index: 4, kind: input, shape index: {}]
  %s5 = inlined_call_operand.hbm [shape: f32[128,128], index: 5, kind: output, shape index: {}]
  %s6 = sld [smem:[#allocation0]]
  $region30: #{tpu_custom_call.1} parent=0
    _
  %s8 = ssub.s32 1, %s6
  %s9 = scalar_select 0, %s8, %s6
  $region1: #{tpu_custom_call.1} parent=0
    #allocation2 [shape = 'u8[65536]{0}', space=vmem, size = 0x10000, scoped, tag = 'output window, operand 0, single buffered']
    #allocation3 [shape = 's32[1]{0}', space=sflag, size = 0x4, scoped, tag = 'scoped memory for tpu_custom_call.1']
    %10 = vsyncpa [#allocation3], 0
    // Predicated region
    $region2: #{tpu_custom_call.1} parent=1 // pred_check
      _
    $region3: #{tpu_custom_call.1} parent=1 // pred_check_branch
      %12 = sbr.rel (0) target = $region5
    $region4: #{tpu_custom_call.1} parent=1 // pred_region
      _
    $region5: #{tpu_custom_call.1} parent=1 // pred_fallthru
      _
    // Predicated region
    $region6: #{tpu_custom_call.1} parent=1 // pred_check
      _
    $region7: #{tpu_custom_call.1} parent=1 // pred_check_branch
      %14 = sbr.rel (0) target = $region9
    $region8: #{tpu_custom_call.1} parent=1 // pred_region
      _
    $region9: #{tpu_custom_call.1} parent=1 // pred_fallthru
      _
    // Predicated region
    $region10: #{tpu_custom_call.1} parent=1 // pred_check
      _
    $region11: #{tpu_custom_call.1} parent=1 // pred_check_branch
      %16 = sbr.rel (0) target = $region13
    $region12: #{tpu_custom_call.1} parent=1 // pred_region
      _
    $region13: #{tpu_custom_call.1} parent=1 // pred_fallthru
      _
    // Predicated region
    $region14: #{tpu_custom_call.1} parent=1 // pred_check
      _
    $region15: #{tpu_custom_call.1} parent=1 // pred_check_branch
      %18 = sbr.rel (0) target = $region17
    $region16: #{tpu_custom_call.1} parent=1 // pred_region
      _
    $region17: #{tpu_custom_call.1} parent=1 // pred_fallthru
      _
    // Predicated region
    $region18: #{tpu_custom_call.1} parent=1 // pred_check
      _
    $region19: #{tpu_custom_call.1} parent=1 // pred_check_branch
      %20 = sbr.rel (0) target = $region21
    $region20: #{tpu_custom_call.1} parent=1 // pred_region
      _
    $region21: #{tpu_custom_call.1} parent=1 // pred_fallthru
      _
    %v21 = vld [vmem:[%s0] sm:$0xff]
    %v22 = vld [vmem:[%s0 + $0x8] sm:$0xff]
    %v23 = vld [vmem:[%s0 + $0x10] sm:$0xff]
    %v24 = vld [vmem:[%s0 + $0x18] sm:$0xff]
    %v25 = vld [vmem:[%s0 + $0x20] sm:$0xff]
    %v26 = vld [vmem:[%s0 + $0x28] sm:$0xff]
    %v27 = vld [vmem:[%s0 + $0x30] sm:$0xff]
    %v28 = vld [vmem:[%s0 + $0x38] sm:$0xff]
    %v29 = vld [vmem:[%s0 + $0x40] sm:$0xff]
    %v30 = vld [vmem:[%s0 + $0x48] sm:$0xff]
    %v31 = vld [vmem:[%s0 + $0x50] sm:$0xff]
    %v32 = vld [vmem:[%s0 + $0x58] sm:$0xff]
    %v33 = vld [vmem:[%s0 + $0x60] sm:$0xff]
    %v34 = vld [vmem:[%s0 + $0x68] sm:$0xff]
    %v35 = vld [vmem:[%s0 + $0x70] sm:$0xff]
    %v36 = vld [vmem:[%s0 + $0x78] sm:$0xff]
    %v37 = vld [vmem:[%s1] sm:$0xff]
    %v38 = vld [vmem:[%s1 + $0x8] sm:$0xff]
    %v39 = vld [vmem:[%s1 + $0x10] sm:$0xff]
    %v40 = vld [vmem:[%s1 + $0x18] sm:$0xff]
    %v41 = vld [vmem:[%s2] sm:$0x1]
    %v43 = vperm.slane %v41, 0
    %vm45 = vcmask 261120
    %v47 = vsel %vm45, %v21, 0
    %v50 = vsel %vm45, %v22, 0
    %v53 = vsel %vm45, %v23, 0
    %v56 = vsel %vm45, %v24, 0
    %v59 = vsel %vm45, %v25, 0
    %v62 = vsel %vm45, %v26, 0
    %v65 = vsel %vm45, %v27, 0
    %v68 = vsel %vm45, %v28, 0
    %v71 = vsel %vm45, %v29, 0
    %v74 = vsel %vm45, %v30, 0
    %v77 = vsel %vm45, %v31, 0
    %v80 = vsel %vm45, %v32, 0
    %v83 = vsel %vm45, %v33, 0
    %v86 = vsel %vm45, %v34, 0
    %v89 = vsel %vm45, %v35, 0
    %v92 = vsel %vm45, %v36, 0
    %94 = vmatpush.msra.mxu0 0.0
    %95 = vmatpush.msra.mxu0 0.0
    %96 = vmatpush.msra.mxu0 0.0
    %97 = vmatpush.msra.mxu0 0.0
    %98 = vmatpush.msra.mxu0 0.0
    %99 = vmatpush.msra.mxu0 0.0
    %100 = vmatpush.msra.mxu0 0.0
    %101 = vmatpush.msra.mxu0 0.0
    %102 = vmatpush.msra.mxu0 0.0
    %103 = vmatpush.msra.mxu0 0.0
    %104 = vmatpush.msra.mxu0 0.0
    %105 = vmatpush.msra.mxu0 0.0
    %106 = vmatpush.msra.mxu0 %v40
    %107 = vmatpush.msra.mxu0 %v39
    %108 = vmatpush.msra.mxu0 %v38
    %109 = vmatpush.msra.mxu0 %v37
    %110 = vmatmul.f32.gmra.mxu0 %v47
    %v111 = vpop.f32.mrf.mxu0
    %v112 = vadd.f32 %v43, %v111
    %113 = vmatmul.f32.gmra.mxu0 %v50
    %v114 = vpop.f32.mrf.mxu0
    %v115 = vadd.f32 %v43, %v114
    %116 = vmatmul.f32.gmra.mxu0 %v53
    %v117 = vpop.f32.mrf.mxu0
    %v118 = vadd.f32 %v43, %v117
    %119 = vmatmul.f32.gmra.mxu0 %v56
    %v120 = vpop.f32.mrf.mxu0
    %v121 = vadd.f32 %v43, %v120
    %122 = vmatmul.f32.gmra.mxu0 %v59
    %v123 = vpop.f32.mrf.mxu0
    %v124 = vadd.f32 %v43, %v123
    %125 = vmatmul.f32.gmra.mxu0 %v62
    %v126 = vpop.f32.mrf.mxu0
    %v127 = vadd.f32 %v43, %v126
    %128 = vmatmul.f32.gmra.mxu0 %v65
    %v129 = vpop.f32.mrf.mxu0
    %v130 = vadd.f32 %v43, %v129
    %131 = vmatmul.f32.gmra.mxu0 %v68
    %v132 = vpop.f32.mrf.mxu0
    %v133 = vadd.f32 %v43, %v132
    %134 = vmatmul.f32.gmra.mxu0 %v71
    %v135 = vpop.f32.mrf.mxu0
    %v136 = vadd.f32 %v43, %v135
    %137 = vmatmul.f32.gmra.mxu0 %v74
    %v138 = vpop.f32.mrf.mxu0
    %v139 = vadd.f32 %v43, %v138
    %140 = vmatmul.f32.gmra.mxu0 %v77
    %v141 = vpop.f32.mrf.mxu0
    %v142 = vadd.f32 %v43, %v141
    %143 = vmatmul.f32.gmra.mxu0 %v80
    %v144 = vpop.f32.mrf.mxu0
    %v145 = vadd.f32 %v43, %v144
    %146 = vmatmul.f32.gmra.mxu0 %v83
    %v147 = vpop.f32.mrf.mxu0
    %v148 = vadd.f32 %v43, %v147
    %149 = vmatmul.f32.gmra.mxu0 %v86
    %v150 = vpop.f32.mrf.mxu0
    %v151 = vadd.f32 %v43, %v150
    %152 = vmatmul.f32.gmra.mxu0 %v89
    %v153 = vpop.f32.mrf.mxu0
    %v154 = vadd.f32 %v43, %v153
    %155 = vmatmul.f32.gmra.mxu0 %v92
    %v156 = vpop.f32.mrf.mxu0
    %v157 = vadd.f32 %v43, %v156
    %158 = vdwg.mxu0
    %v159 = vtanh.pop %v112
    %v160 = vtanh.pop %v115
    %v161 = vtanh.pop %v118
    %v162 = vtanh.pop %v121
    %v163 = vtanh.pop %v124
    %v164 = vtanh.pop %v127
    %v165 = vtanh.pop %v130
    %v166 = vtanh.pop %v133
    %v167 = vtanh.pop %v136
    %v168 = vtanh.pop %v139
    %v169 = vtanh.pop %v142
    %v170 = vtanh.pop %v145
    %v171 = vtanh.pop %v148
    %v172 = vtanh.pop %v151
    %v173 = vtanh.pop %v154
    %v174 = vtanh.pop %v157
    %v175 = vld [vmem:[%s3] sm:$0xff]
    %v176 = vld [vmem:[%s3 + $0x8] sm:$0xff]
    %v177 = vld [vmem:[%s3 + $0x10] sm:$0xff]
    %v178 = vld [vmem:[%s3 + $0x18] sm:$0xff]
    %v179 = vld [vmem:[%s4] sm:$0x1]
    %v181 = vperm.slane %v179, 0
    %v184 = vsel %vm45, %v159, 0
    %v187 = vsel %vm45, %v160, 0
    %v190 = vsel %vm45, %v161, 0
    %v193 = vsel %vm45, %v162, 0
    %v196 = vsel %vm45, %v163, 0
    %v199 = vsel %vm45, %v164, 0
    %v202 = vsel %vm45, %v165, 0
    %v205 = vsel %vm45, %v166, 0
    %v208 = vsel %vm45, %v167, 0
    %v211 = vsel %vm45, %v168, 0
    %v214 = vsel %vm45, %v169, 0
    %v217 = vsel %vm45, %v170, 0
    %v220 = vsel %vm45, %v171, 0
    %v223 = vsel %vm45, %v172, 0
    %v226 = vsel %vm45, %v173, 0
    %v229 = vsel %vm45, %v174, 0
    %231 = vmatpush.msra.mxu0 0.0
    %232 = vmatpush.msra.mxu0 0.0
    %233 = vmatpush.msra.mxu0 0.0
    %234 = vmatpush.msra.mxu0 0.0
    %235 = vmatpush.msra.mxu0 0.0
    %236 = vmatpush.msra.mxu0 0.0
    %237 = vmatpush.msra.mxu0 0.0
    %238 = vmatpush.msra.mxu0 0.0
    %239 = vmatpush.msra.mxu0 0.0
    %240 = vmatpush.msra.mxu0 0.0
    %241 = vmatpush.msra.mxu0 0.0
    %242 = vmatpush.msra.mxu0 0.0
    %243 = vmatpush.msra.mxu0 %v178
    %244 = vmatpush.msra.mxu0 %v177
    %245 = vmatpush.msra.mxu0 %v176
    %246 = vmatpush.msra.mxu0 %v175
    %247 = vmatmul.f32.gmra.mxu0 %v184
    %v248 = vpop.f32.mrf.mxu0
    %v249 = vadd.f32 %v181, %v248
    %250 = vmatmul.f32.gmra.mxu0 %v187
    %v251 = vpop.f32.mrf.mxu0
    %v252 = vadd.f32 %v181, %v251
    %253 = vmatmul.f32.gmra.mxu0 %v190
    %v254 = vpop.f32.mrf.mxu0
    %v255 = vadd.f32 %v181, %v254
    %256 = vmatmul.f32.gmra.mxu0 %v193
    %v257 = vpop.f32.mrf.mxu0
    %v258 = vadd.f32 %v181, %v257
    %259 = vmatmul.f32.gmra.mxu0 %v196
    %v260 = vpop.f32.mrf.mxu0
    %v261 = vadd.f32 %v181, %v260
    %262 = vmatmul.f32.gmra.mxu0 %v199
    %v263 = vpop.f32.mrf.mxu0
    %v264 = vadd.f32 %v181, %v263
    %265 = vmatmul.f32.gmra.mxu0 %v202
    %v266 = vpop.f32.mrf.mxu0
    %v267 = vadd.f32 %v181, %v266
    %268 = vmatmul.f32.gmra.mxu0 %v205
    %v269 = vpop.f32.mrf.mxu0
    %v270 = vadd.f32 %v181, %v269
    %271 = vmatmul.f32.gmra.mxu0 %v208
    %v272 = vpop.f32.mrf.mxu0
    %v273 = vadd.f32 %v181, %v272
    %274 = vmatmul.f32.gmra.mxu0 %v211
    %v275 = vpop.f32.mrf.mxu0
    %v276 = vadd.f32 %v181, %v275
    %277 = vmatmul.f32.gmra.mxu0 %v214
    %v278 = vpop.f32.mrf.mxu0
    %v279 = vadd.f32 %v181, %v278
    %280 = vmatmul.f32.gmra.mxu0 %v217
    %v281 = vpop.f32.mrf.mxu0
    %v282 = vadd.f32 %v181, %v281
    %283 = vmatmul.f32.gmra.mxu0 %v220
    %v284 = vpop.f32.mrf.mxu0
    %v285 = vadd.f32 %v181, %v284
    %286 = vmatmul.f32.gmra.mxu0 %v223
    %v287 = vpop.f32.mrf.mxu0
    %v288 = vadd.f32 %v181, %v287
    %289 = vmatmul.f32.gmra.mxu0 %v226
    %v290 = vpop.f32.mrf.mxu0
    %v291 = vadd.f32 %v181, %v290
    %292 = vmatmul.f32.gmra.mxu0 %v229
    %v293 = vpop.f32.mrf.mxu0
    %v294 = vadd.f32 %v181, %v293
    %295 = vdwg.mxu0
    %296 = vst [vmem:[#allocation2] sm:$0xff] %v249
    %297 = vst [vmem:[#allocation2 + $0x8] sm:$0xff] %v252
    %298 = vst [vmem:[#allocation2 + $0x10] sm:$0xff] %v255
    %299 = vst [vmem:[#allocation2 + $0x18] sm:$0xff] %v258
    %300 = vst [vmem:[#allocation2 + $0x20] sm:$0xff] %v261
    %301 = vst [vmem:[#allocation2 + $0x28] sm:$0xff] %v264
    %302 = vst [vmem:[#allocation2 + $0x30] sm:$0xff] %v267
    %303 = vst [vmem:[#allocation2 + $0x38] sm:$0xff] %v270
    %304 = vst [vmem:[#allocation2 + $0x40] sm:$0xff] %v273
    %305 = vst [vmem:[#allocation2 + $0x48] sm:$0xff] %v276
    %306 = vst [vmem:[#allocation2 + $0x50] sm:$0xff] %v279
    %307 = vst [vmem:[#allocation2 + $0x58] sm:$0xff] %v282
    %308 = vst [vmem:[#allocation2 + $0x60] sm:$0xff] %v285
    %309 = vst [vmem:[#allocation2 + $0x68] sm:$0xff] %v288
    %310 = vst [vmem:[#allocation2 + $0x70] sm:$0xff] %v291
    %311 = vst [vmem:[#allocation2 + $0x78] sm:$0xff] %v294
    // Predicated region
    $region22: #{tpu_custom_call.1} parent=1 // pred_check
      _
    $region23: #{tpu_custom_call.1} parent=1 // pred_check_branch
      %313 = sbr.rel (0) target = $region25
    $region24: #{tpu_custom_call.1} parent=1 // pred_region
      %315 = vsyncadd [#allocation3], 0
      %s316 = sshll.u32 [#allocation2], 4
      %s317 = int_to_ptr.vmem [resolvable:$true] %s316
      %s318 = sshll.u32 %s5, 4
      %s319 = int_to_ptr.hbm [resolvable:$true] %s318
      %324 = dma.vmem_to_hbm [thread:$0]  %s317, 2048, %s319, [#allocation3], 128, 128, 8
    $region25: #{tpu_custom_call.1} parent=1 // pred_fallthru
      _
    // Predicated region
    $region26: #{tpu_custom_call.1} parent=1 // pred_check
      _
    $region27: #{tpu_custom_call.1} parent=1 // pred_check_branch
      %326 = sbr.rel (0) target = $region29
    $region28: #{tpu_custom_call.1} parent=1 // pred_region
      %328 = dma.done [#allocation3], 2048
    $region29: #{tpu_custom_call.1} parent=1 // pred_fallthru
      _
    %329 = vsyncpa [#allocation3], 1

</llo_original>
